<compile_context>
chip_gen: v6e
topology: v6e:2x2x1
jax: 0.10.0
libtpu: 0.0.40
codegen_flags: <defaults>
</compile_context>

<pallas_src>
import functools

import jax
import jax.numpy as jnp
from jax.experimental import pallas as pl
from jax.experimental.pallas import tpu as pltpu

DROPOUT_P = 0.25
LAYER_DIMS = [(30, 16), (16, 18), (18, 20), (20, 24), (24, 1)]


def _round_up(n, m):
    return ((n + m - 1) // m) * m


def fraud_kernel(x_ref, mask_ref,
                 w1_ref, b1_ref, w2_ref, b2_ref, w3_ref, b3_ref,
                 w4_ref, b4_ref, w5_ref, b5_ref, o_ref):
    # x_ref: (30, TILE_B); weights are (out, in); biases (out, 1); out (1, TILE_B).
    x = x_ref[...]

    # fc1 + relu
    h = jnp.dot(w1_ref[...], x, preferred_element_type=jnp.float32) + b1_ref[...]
    h = jnp.maximum(h, 0.0)                       # (16, TILE_B)

    # fc2 + relu
    h = jnp.dot(w2_ref[...], h, preferred_element_type=jnp.float32) + b2_ref[...]
    h = jnp.maximum(h, 0.0)                       # (18, TILE_B)

    # dropout(p=0.25), training semantics: mask is pre-scaled keep/(1-p)
    h = h * mask_ref[...]

    # fc3 + relu
    h = jnp.dot(w3_ref[...], h, preferred_element_type=jnp.float32) + b3_ref[...]
    h = jnp.maximum(h, 0.0)                       # (20, TILE_B)

    # fc4 + relu
    h = jnp.dot(w4_ref[...], h, preferred_element_type=jnp.float32) + b4_ref[...]
    h = jnp.maximum(h, 0.0)                       # (24, TILE_B)

    # fc5 + sigmoid  -> lane-dense (1, TILE_B) output
    z = jnp.dot(w5_ref[...], h, preferred_element_type=jnp.float32) + b5_ref[...]
    o_ref[...] = jax.nn.sigmoid(z)


def init_params(key):
    """Deterministic init mimicking nn.Linear's U(-1/sqrt(fan_in), 1/sqrt(fan_in)).

    Weights are stored (out_features, in_features), biases (out_features, 1), i.e.
    already in the transposed (feature-major) layout the kernel expects.
    """
    params = []
    for fan_in, fan_out in LAYER_DIMS:
        key, kw, kb = jax.random.split(key, 3)
        bound = 1.0 / (fan_in ** 0.5)
        w = jax.random.uniform(kw, (fan_out, fan_in), jnp.float32, -bound, bound)
        b = jax.random.uniform(kb, (fan_out, 1), jnp.float32, -bound, bound)
        params.append((w, b))
    return params


@functools.partial(jax.jit, static_argnames=("training", "tile_b"))
def _fraud_net_impl(x, params, dropout_key, *, training, tile_b):
    B = x.shape[0]
    in_dim = LAYER_DIMS[0][0]
    drop_dim = LAYER_DIMS[1][1]   # 18: width of the layer dropout is applied to

    # Batch goes on lanes -> tile must be a multiple of 128 (or the padded extent).
    tb = min(tile_b, _round_up(B, 128))
    b_pad = _round_up(B, tb)
    n_tiles = b_pad // tb

    # Pad batch, transpose to feature-major (30, B_pad).
    x_p = jnp.pad(x.astype(jnp.float32), ((0, b_pad - B), (0, 0)))
    x_t = x_p.T

    # Inverted-dropout mask, pre-scaled by 1/(1-p); host-side RNG (decorrelated per tile).
    if training:
        keep = jax.random.bernoulli(dropout_key, 1.0 - DROPOUT_P, (drop_dim, b_pad))
        mask = keep.astype(jnp.float32) * (1.0 / (1.0 - DROPOUT_P))
    else:
        mask = jnp.ones((drop_dim, b_pad), jnp.float32)

    flat = []
    for w, b in params:
        flat.extend([w, b])

    const_specs = [pl.BlockSpec(p.shape, lambda i: (0, 0)) for p in flat]

    out = pl.pallas_call(
        fraud_kernel,
        out_shape=jax.ShapeDtypeStruct((1, b_pad), jnp.float32),
        grid=(n_tiles,),
        in_specs=[
            pl.BlockSpec((in_dim, tb), lambda i: (0, i)),     # x tile, pipelined
            pl.BlockSpec((drop_dim, tb), lambda i: (0, i)),   # dropout mask tile
        ] + const_specs,                                      # weights stay resident
        out_specs=pl.BlockSpec((1, tb), lambda i: (0, i)),
        compiler_params=pltpu.CompilerParams(
            dimension_semantics=("parallel",),                # v7x: shard batch over 2 TCs
        ),
    )(x_t, mask, *flat)

    return out[:, :B].T                                       # (B, 1)


def fraud_net(x, params, dropout_key=None, *, training=True, tile_b=2048):
    """Forward pass matching FraudNet.forward (F.dropout defaults to training=True)."""
    if dropout_key is None:
        dropout_key = jax.random.PRNGKey(0)
    # TODO(synk): dropout uses jax.random (host-generated mask) rather than torch's
    # global RNG stream; statistically equivalent but not bit-identical to PyTorch.
    return _fraud_net_impl(x, tuple(params), dropout_key,
                           training=training, tile_b=tile_b)


if __name__ == "__main__":
    key = jax.random.PRNGKey(0)
    k_params, k_x, k_drop = jax.random.split(key, 3)

    params = init_params(k_params)
    x = jax.random.normal(k_x, (8, 30), jnp.float32)

    out = fraud_net(x, params, k_drop, training=True)
    out = jax.block_until_ready(out)

    assert out.shape == (8, 1)
    assert out.dtype == jnp.float32
    assert bool(jnp.all((out >= 0.0) & (out <= 1.0)))
    assert bool(jnp.all(jnp.isfinite(out)))
    print("KERNEL_OK")
</pallas_src>

<mosaic_0001>
module attributes {stable_mosaic.version = 11 : i64} {
  func.func @fraud_kernel(%arg0: i32, %arg1: memref<30x128xf32, #tpu.memory_space<vmem>>, %arg2: memref<18x128xf32, #tpu.memory_space<vmem>>, %arg3: memref<16x30xf32, #tpu.memory_space<vmem>>, %arg4: memref<16x1xf32, #tpu.memory_space<vmem>>, %arg5: memref<18x16xf32, #tpu.memory_space<vmem>>, %arg6: memref<18x1xf32, #tpu.memory_space<vmem>>, %arg7: memref<20x18xf32, #tpu.memory_space<vmem>>, %arg8: memref<20x1xf32, #tpu.memory_space<vmem>>, %arg9: memref<24x20xf32, #tpu.memory_space<vmem>>, %arg10: memref<24x1xf32, #tpu.memory_space<vmem>>, %arg11: memref<1x24xf32, #tpu.memory_space<vmem>>, %arg12: memref<1x1xf32, #tpu.memory_space<vmem>>, %arg13: memref<1x128xf32, #tpu.memory_space<vmem>>) attributes {dimension_semantics = [#tpu.dimension_semantics<parallel>], iteration_bounds = array<i64: 1>, scalar_prefetch = 0 : i64, scratch_operands = 0 : i64, tpu.core_type = #tpu.core_type<tc>, window_params = [{transform_indices = @transform_0, window_bounds = array<i64: 30, 128>}, {transform_indices = @transform_1, window_bounds = array<i64: 18, 128>}, {pipeline_mode = #tpu.pipeline_mode<synchronous>, transform_indices = @transform_2, window_bounds = array<i64: 16, 30>}, {pipeline_mode = #tpu.pipeline_mode<synchronous>, transform_indices = @transform_3, window_bounds = array<i64: 16, 1>}, {pipeline_mode = #tpu.pipeline_mode<synchronous>, transform_indices = @transform_4, window_bounds = array<i64: 18, 16>}, {pipeline_mode = #tpu.pipeline_mode<synchronous>, transform_indices = @transform_5, window_bounds = array<i64: 18, 1>}, {pipeline_mode = #tpu.pipeline_mode<synchronous>, transform_indices = @transform_6, window_bounds = array<i64: 20, 18>}, {pipeline_mode = #tpu.pipeline_mode<synchronous>, transform_indices = @transform_7, window_bounds = array<i64: 20, 1>}, {pipeline_mode = #tpu.pipeline_mode<synchronous>, transform_indices = @transform_8, window_bounds = array<i64: 24, 20>}, {pipeline_mode = #tpu.pipeline_mode<synchronous>, transform_indices = @transform_9, window_bounds = array<i64: 24, 1>}, {pipeline_mode = #tpu.pipeline_mode<synchronous>, transform_indices = @transform_10, window_bounds = array<i64: 1, 24>}, {pipeline_mode = #tpu.pipeline_mode<synchronous>, transform_indices = @transform_11, window_bounds = array<i64: 1, 1>}, {transform_indices = @transform_12, window_bounds = array<i64: 1, 128>}]} {
    %c0 = arith.constant 0 : index
    %c0_0 = arith.constant 0 : index
    %0 = vector.load %arg1[%c0, %c0_0] : memref<30x128xf32, #tpu.memory_space<vmem>>, vector<30x128xf32>
    %c0_1 = arith.constant 0 : index
    %c0_2 = arith.constant 0 : index
    %1 = vector.load %arg3[%c0_1, %c0_2] : memref<16x30xf32, #tpu.memory_space<vmem>>, vector<16x30xf32>
    %cst = arith.constant dense<0.000000e+00> : vector<16x128xf32>
    %2 = tpu.matmul %1, %0, %cst {dimension_numbers = #tpu.dot_dimension_numbers<[1], [0], [0], [1], [0, 0, 1, 1], [], []>} : vector<16x30xf32>, vector<30x128xf32>, vector<16x128xf32> -> vector<16x128xf32>
    %c0_3 = arith.constant 0 : index
    %c0_4 = arith.constant 0 : index
    %3 = vector.load %arg4[%c0_3, %c0_4] : memref<16x1xf32, #tpu.memory_space<vmem>>, vector<16x1xf32>
    %4 = vector.broadcast %3 : vector<16x1xf32> to vector<16x128xf32>
    %5 = arith.addf %2, %4 : vector<16x128xf32>
    %cst_5 = arith.constant 0.000000e+00 : f32
    %6 = vector.broadcast %cst_5 : f32 to vector<16x128xf32>
    %7 = arith.maximumf %5, %6 : vector<16x128xf32>
    %c0_6 = arith.constant 0 : index
    %c0_7 = arith.constant 0 : index
    %8 = vector.load %arg5[%c0_6, %c0_7] : memref<18x16xf32, #tpu.memory_space<vmem>>, vector<18x16xf32>
    %cst_8 = arith.constant dense<0.000000e+00> : vector<18x128xf32>
    %9 = tpu.matmul %8, %7, %cst_8 {dimension_numbers = #tpu.dot_dimension_numbers<[1], [0], [0], [1], [0, 0, 1, 1], [], []>} : vector<18x16xf32>, vector<16x128xf32>, vector<18x128xf32> -> vector<18x128xf32>
    %c0_9 = arith.constant 0 : index
    %c0_10 = arith.constant 0 : index
    %10 = vector.load %arg6[%c0_9, %c0_10] : memref<18x1xf32, #tpu.memory_space<vmem>>, vector<18x1xf32>
    %11 = vector.broadcast %10 : vector<18x1xf32> to vector<18x128xf32>
    %12 = arith.addf %9, %11 : vector<18x128xf32>
    %cst_11 = arith.constant 0.000000e+00 : f32
    %13 = vector.broadcast %cst_11 : f32 to vector<18x128xf32>
    %14 = arith.maximumf %12, %13 : vector<18x128xf32>
    %c0_12 = arith.constant 0 : index
    %c0_13 = arith.constant 0 : index
    %15 = vector.load %arg2[%c0_12, %c0_13] : memref<18x128xf32, #tpu.memory_space<vmem>>, vector<18x128xf32>
    %16 = arith.mulf %14, %15 : vector<18x128xf32>
    %c0_14 = arith.constant 0 : index
    %c0_15 = arith.constant 0 : index
    %17 = vector.load %arg7[%c0_14, %c0_15] : memref<20x18xf32, #tpu.memory_space<vmem>>, vector<20x18xf32>
    %cst_16 = arith.constant dense<0.000000e+00> : vector<20x128xf32>
    %18 = tpu.matmul %17, %16, %cst_16 {dimension_numbers = #tpu.dot_dimension_numbers<[1], [0], [0], [1], [0, 0, 1, 1], [], []>} : vector<20x18xf32>, vector<18x128xf32>, vector<20x128xf32> -> vector<20x128xf32>
    %c0_17 = arith.constant 0 : index
    %c0_18 = arith.constant 0 : index
    %19 = vector.load %arg8[%c0_17, %c0_18] : memref<20x1xf32, #tpu.memory_space<vmem>>, vector<20x1xf32>
    %20 = vector.broadcast %19 : vector<20x1xf32> to vector<20x128xf32>
    %21 = arith.addf %18, %20 : vector<20x128xf32>
    %cst_19 = arith.constant 0.000000e+00 : f32
    %22 = vector.broadcast %cst_19 : f32 to vector<20x128xf32>
    %23 = arith.maximumf %21, %22 : vector<20x128xf32>
    %c0_20 = arith.constant 0 : index
    %c0_21 = arith.constant 0 : index
    %24 = vector.load %arg9[%c0_20, %c0_21] : memref<24x20xf32, #tpu.memory_space<vmem>>, vector<24x20xf32>
    %cst_22 = arith.constant dense<0.000000e+00> : vector<24x128xf32>
    %25 = tpu.matmul %24, %23, %cst_22 {dimension_numbers = #tpu.dot_dimension_numbers<[1], [0], [0], [1], [0, 0, 1, 1], [], []>} : vector<24x20xf32>, vector<20x128xf32>, vector<24x128xf32> -> vector<24x128xf32>
    %c0_23 = arith.constant 0 : index
    %c0_24 = arith.constant 0 : index
    %26 = vector.load %arg10[%c0_23, %c0_24] : memref<24x1xf32, #tpu.memory_space<vmem>>, vector<24x1xf32>
    %27 = vector.broadcast %26 : vector<24x1xf32> to vector<24x128xf32>
    %28 = arith.addf %25, %27 : vector<24x128xf32>
    %cst_25 = arith.constant 0.000000e+00 : f32
    %29 = vector.broadcast %cst_25 : f32 to vector<24x128xf32>
    %30 = arith.maximumf %28, %29 : vector<24x128xf32>
    %c0_26 = arith.constant 0 : index
    %c0_27 = arith.constant 0 : index
    %31 = vector.load %arg11[%c0_26, %c0_27] : memref<1x24xf32, #tpu.memory_space<vmem>>, vector<1x24xf32>
    %cst_28 = arith.constant dense<0.000000e+00> : vector<1x128xf32>
    %32 = tpu.matmul %31, %30, %cst_28 {dimension_numbers = #tpu.dot_dimension_numbers<[1], [0], [0], [1], [0, 0, 1, 1], [], []>} : vector<1x24xf32>, vector<24x128xf32>, vector<1x128xf32> -> vector<1x128xf32>
    %c0_29 = arith.constant 0 : index
    %c0_30 = arith.constant 0 : index
    %33 = vector.load %arg12[%c0_29, %c0_30] : memref<1x1xf32, #tpu.memory_space<vmem>>, vector<1x1xf32>
    %34 = vector.broadcast %33 : vector<1x1xf32> to vector<1x128xf32>
    %35 = arith.addf %32, %34 : vector<1x128xf32>
    %36 = arith.negf %35 : vector<1x128xf32>
    %37 = math.exp %36 : vector<1x128xf32>
    %cst_31 = arith.constant 1.000000e+00 : f32
    %38 = vector.broadcast %cst_31 : f32 to vector<1x128xf32>
    %39 = arith.addf %38, %37 : vector<1x128xf32>
    %40 = arith.divf %38, %39 : vector<1x128xf32>
    %c0_32 = arith.constant 0 : index
    %c0_33 = arith.constant 0 : index
    %41 = vector.load %arg13[%c0_32, %c0_33] : memref<1x128xf32, #tpu.memory_space<vmem>>, vector<1x128xf32>
    tpu.vector_store %arg13[%c0_32, %c0_33], %40 {strides = array<i32>} : memref<1x128xf32, #tpu.memory_space<vmem>>, vector<1x128xf32>,
    return
  }
  func.func @transform_0(%arg0: i32) -> (i32, i32) {
    %c0_i32 = arith.constant 0 : i32
    %c0_i32_0 = arith.constant 0 : i32
    return %c0_i32, %arg0 : i32, i32
  }
  func.func @transform_1(%arg0: i32) -> (i32, i32) {
    %c0_i32 = arith.constant 0 : i32
    %c0_i32_0 = arith.constant 0 : i32
    return %c0_i32, %arg0 : i32, i32
  }
  func.func @transform_2(%arg0: i32) -> (i32, i32) {
    %c0_i32 = arith.constant 0 : i32
    %c0_i32_0 = arith.constant 0 : i32
    %c0_i32_1 = arith.constant 0 : i32
    return %c0_i32, %c0_i32_0 : i32, i32
  }
  func.func @transform_3(%arg0: i32) -> (i32, i32) {
    %c0_i32 = arith.constant 0 : i32
    %c0_i32_0 = arith.constant 0 : i32
    %c0_i32_1 = arith.constant 0 : i32
    return %c0_i32, %c0_i32_0 : i32, i32
  }
  func.func @transform_4(%arg0: i32) -> (i32, i32) {
    %c0_i32 = arith.constant 0 : i32
    %c0_i32_0 = arith.constant 0 : i32
    %c0_i32_1 = arith.constant 0 : i32
    return %c0_i32, %c0_i32_0 : i32, i32
  }
  func.func @transform_5(%arg0: i32) -> (i32, i32) {
    %c0_i32 = arith.constant 0 : i32
    %c0_i32_0 = arith.constant 0 : i32
    %c0_i32_1 = arith.constant 0 : i32
    return %c0_i32, %c0_i32_0 : i32, i32
  }
  func.func @transform_6(%arg0: i32) -> (i32, i32) {
    %c0_i32 = arith.constant 0 : i32
    %c0_i32_0 = arith.constant 0 : i32
    %c0_i32_1 = arith.constant 0 : i32
    return %c0_i32, %c0_i32_0 : i32, i32
  }
  func.func @transform_7(%arg0: i32) -> (i32, i32) {
    %c0_i32 = arith.constant 0 : i32
    %c0_i32_0 = arith.constant 0 : i32
    %c0_i32_1 = arith.constant 0 : i32
    return %c0_i32, %c0_i32_0 : i32, i32
  }
  func.func @transform_8(%arg0: i32) -> (i32, i32) {
    %c0_i32 = arith.constant 0 : i32
    %c0_i32_0 = arith.constant 0 : i32
    %c0_i32_1 = arith.constant 0 : i32
    return %c0_i32, %c0_i32_0 : i32, i32
  }
  func.func @transform_9(%arg0: i32) -> (i32, i32) {
    %c0_i32 = arith.constant 0 : i32
    %c0_i32_0 = arith.constant 0 : i32
    %c0_i32_1 = arith.constant 0 : i32
    return %c0_i32, %c0_i32_0 : i32, i32
  }
  func.func @transform_10(%arg0: i32) -> (i32, i32) {
    %c0_i32 = arith.constant 0 : i32
    %c0_i32_0 = arith.constant 0 : i32
    %c0_i32_1 = arith.constant 0 : i32
    return %c0_i32, %c0_i32_0 : i32, i32
  }
  func.func @transform_11(%arg0: i32) -> (i32, i32) {
    %c0_i32 = arith.constant 0 : i32
    %c0_i32_0 = arith.constant 0 : i32
    %c0_i32_1 = arith.constant 0 : i32
    return %c0_i32, %c0_i32_0 : i32, i32
  }
  func.func @transform_12(%arg0: i32) -> (i32, i32) {
    %c0_i32 = arith.constant 0 : i32
    %c0_i32_0 = arith.constant 0 : i32
    return %c0_i32, %arg0 : i32, i32
  }
}

</mosaic_0001>

<llo_original>
// kernel: _fraud_net_impl.1
$region0: #{_fraud_net_impl.1}
  #allocation0 [shape = 'u32[]', space=smem, size = 0x4, offset = 0x4, fixed_abs, tag = 'smem constant byte address 0x4 - core index']
  #allocation1 [shape = 'u32[144,128]{1,0:T(1,128)}', space=vmem, size = 0x12000, scoped, tag = 'internal scratch']
  #allocation2 [shape = 'f32[1,1]{1,0:T(1,128)S(1)}', space=vmem, size = 0x200, scoped, tag = 'scoped memory for _fraud_net_impl.1']
  %s0 = inlined_call_operand.vmem [shape: f32[30,128], index: 0, kind: input, shape index: {}]
  %s1 = inlined_call_operand.vmem [shape: f32[18,128], index: 1, kind: input, shape index: {}]
  %s2 = inlined_call_operand.vmem [shape: f32[16,30], index: 2, kind: input, shape index: {}]
  %s3 = inlined_call_operand.vmem [shape: f32[16,1], index: 3, kind: input, shape index: {}]
  %s4 = inlined_call_operand.vmem [shape: f32[18,16], index: 4, kind: input, shape index: {}]
  %s5 = inlined_call_operand.vmem [shape: f32[18,1], index: 5, kind: input, shape index: {}]
  %s6 = inlined_call_operand.vmem [shape: f32[20,18], index: 6, kind: input, shape index: {}]
  %s7 = inlined_call_operand.vmem [shape: f32[20,1], index: 7, kind: input, shape index: {}]
  %s8 = inlined_call_operand.vmem [shape: f32[24,20], index: 8, kind: input, shape index: {}]
  %s9 = inlined_call_operand.vmem [shape: f32[24,1], index: 9, kind: input, shape index: {}]
  %s10 = inlined_call_operand.vmem [shape: f32[1,24], index: 10, kind: input, shape index: {}]
  %s11 = inlined_call_operand.<no memory space> [shape: f32[1,1], index: 11, kind: input, shape index: {}]
  %s12 = inlined_call_operand.vmem [shape: f32[1,128], index: 12, kind: output, shape index: {}]
  %s13 = sld [smem:[#allocation0]]
  $region58: #{_fraud_net_impl.1} parent=0
    _
  %s15 = ssub.s32 1, %s13
  %s16 = scalar_select 0, %s15, %s13
  %v17 = vstv %s11
  %18 = vst [vmem:[#allocation2] sm:$0x1] %v17
  // Predicated region
  $region2: #{_fraud_net_impl.1} parent=0 // pred_check
    _
  $region3: #{_fraud_net_impl.1} parent=0 // pred_check_branch
    %20 = sbr.rel (0) target = $region5
  $region4: #{_fraud_net_impl.1} parent=0 // pred_region
    _
  $region5: #{_fraud_net_impl.1} parent=0 // pred_fallthru
    _
  // Predicated region
  $region6: #{_fraud_net_impl.1} parent=0 // pred_check
    _
  $region7: #{_fraud_net_impl.1} parent=0 // pred_check_branch
    %22 = sbr.rel (0) target = $region9
  $region8: #{_fraud_net_impl.1} parent=0 // pred_region
    _
  $region9: #{_fraud_net_impl.1} parent=0 // pred_fallthru
    _
  // Predicated region
  $region10: #{_fraud_net_impl.1} parent=0 // pred_check
    _
  $region11: #{_fraud_net_impl.1} parent=0 // pred_check_branch
    %24 = sbr.rel (0) target = $region13
  $region12: #{_fraud_net_impl.1} parent=0 // pred_region
    _
  $region13: #{_fraud_net_impl.1} parent=0 // pred_fallthru
    _
  // Predicated region
  $region14: #{_fraud_net_impl.1} parent=0 // pred_check
    _
  $region15: #{_fraud_net_impl.1} parent=0 // pred_check_branch
    %26 = sbr.rel (0) target = $region17
  $region16: #{_fraud_net_impl.1} parent=0 // pred_region
    _
  $region17: #{_fraud_net_impl.1} parent=0 // pred_fallthru
    _
  // Predicated region
  $region18: #{_fraud_net_impl.1} parent=0 // pred_check
    _
  $region19: #{_fraud_net_impl.1} parent=0 // pred_check_branch
    %28 = sbr.rel (0) target = $region21
  $region20: #{_fraud_net_impl.1} parent=0 // pred_region
    _
  $region21: #{_fraud_net_impl.1} parent=0 // pred_fallthru
    _
  // Predicated region
  $region22: #{_fraud_net_impl.1} parent=0 // pred_check
    _
  $region23: #{_fraud_net_impl.1} parent=0 // pred_check_branch
    %30 = sbr.rel (0) target = $region25
  $region24: #{_fraud_net_impl.1} parent=0 // pred_region
    _
  $region25: #{_fraud_net_impl.1} parent=0 // pred_fallthru
    _
  // Predicated region
  $region26: #{_fraud_net_impl.1} parent=0 // pred_check
    _
  $region27: #{_fraud_net_impl.1} parent=0 // pred_check_branch
    %32 = sbr.rel (0) target = $region29
  $region28: #{_fraud_net_impl.1} parent=0 // pred_region
    _
  $region29: #{_fraud_net_impl.1} parent=0 // pred_fallthru
    _
  // Predicated region
  $region30: #{_fraud_net_impl.1} parent=0 // pred_check
    _
  $region31: #{_fraud_net_impl.1} parent=0 // pred_check_branch
    %34 = sbr.rel (0) target = $region33
  $region32: #{_fraud_net_impl.1} parent=0 // pred_region
    _
  $region33: #{_fraud_net_impl.1} parent=0 // pred_fallthru
    _
  // Predicated region
  $region34: #{_fraud_net_impl.1} parent=0 // pred_check
    _
  $region35: #{_fraud_net_impl.1} parent=0 // pred_check_branch
    %36 = sbr.rel (0) target = $region37
  $region36: #{_fraud_net_impl.1} parent=0 // pred_region
    _
  $region37: #{_fraud_net_impl.1} parent=0 // pred_fallthru
    _
  // Predicated region
  $region38: #{_fraud_net_impl.1} parent=0 // pred_check
    _
  $region39: #{_fraud_net_impl.1} parent=0 // pred_check_branch
    %38 = sbr.rel (0) target = $region41
  $region40: #{_fraud_net_impl.1} parent=0 // pred_region
    _
  $region41: #{_fraud_net_impl.1} parent=0 // pred_fallthru
    _
  // Predicated region
  $region42: #{_fraud_net_impl.1} parent=0 // pred_check
    _
  $region43: #{_fraud_net_impl.1} parent=0 // pred_check_branch
    %40 = sbr.rel (0) target = $region45
  $region44: #{_fraud_net_impl.1} parent=0 // pred_region
    _
  $region45: #{_fraud_net_impl.1} parent=0 // pred_fallthru
    _
  // Predicated region
  $region46: #{_fraud_net_impl.1} parent=0 // pred_check
    _
  $region47: #{_fraud_net_impl.1} parent=0 // pred_check_branch
    %42 = sbr.rel (0) target = $region49
  $region48: #{_fraud_net_impl.1} parent=0 // pred_region
    _
  $region49: #{_fraud_net_impl.1} parent=0 // pred_fallthru
    _
  %v43 = vld [vmem:[%s0] sm:$0xff]
  %v44 = vld [vmem:[%s0 + $0x8] sm:$0xff]
  %v45 = vld [vmem:[%s0 + $0x10] sm:$0xff]
  %v46 = vld [vmem:[%s0 + $0x18] sm:$0x3f]
  %v47 = vld [vmem:[%s2] sm:$0xff]
  %v48 = vld [vmem:[%s2 + $0x8] sm:$0xff]
  %v49 = vld [vmem:[%s3] sm:$0xff]
  %v50 = vld [vmem:[%s3 + $0x8] sm:$0xff]
  %52 = vset.pattern.permute.xlu0 0
  %53 = vperm.xlu0 %52, %v49
  %v54 = vpop.permute.xlu0 %53
  %57 = vset.pattern.permute.xlu0 0
  %58 = vperm.xlu0 %57, %v50
  %v59 = vpop.permute.xlu0 %58
  %vm61 = vcmask 244736
  %v63 = vsel %vm61, %v47, 0
  %v66 = vsel %vm61, %v48, 0
  %vm68 = vcmask 1045504
  %v70 = vsel %vm68, %v46, 0
  %72 = vmatprep.subr.mxu0 0.0
  %73 = vmatpush1.msra.mxu0 0.0
  %74 = vmatprep.subr.mxu0 0.0
  %75 = vmatpush1.msra.mxu0 0.0
  %76 = vmatprep.subr.mxu0 0.0
  %77 = vmatpush1.msra.mxu0 0.0
  %78 = vmatprep.subr.mxu0 0.0
  %79 = vmatpush1.msra.mxu0 0.0
  %80 = vmatprep.subr.mxu0 0.0
  %81 = vmatpush1.msra.mxu0 0.0
  %82 = vmatprep.subr.mxu0 0.0
  %83 = vmatpush1.msra.mxu0 0.0
  %84 = vmatprep.subr.mxu0 0.0
  %85 = vmatpush1.msra.mxu0 0.0
  %86 = vmatprep.subr.mxu0 0.0
  %87 = vmatpush1.msra.mxu0 0.0
  %88 = vmatprep.subr.mxu0 0.0
  %89 = vmatpush1.msra.mxu0 0.0
  %90 = vmatprep.subr.mxu0 0.0
  %91 = vmatpush1.msra.mxu0 0.0
  %92 = vmatprep.subr.mxu0 0.0
  %93 = vmatpush1.msra.mxu0 0.0
  %94 = vmatprep.subr.mxu0 0.0
  %95 = vmatpush1.msra.mxu0 0.0
  %96 = vmatprep.subr.mxu0 0.0
  %97 = vmatpush1.msra.mxu0 %v70
  %98 = vmatprep.subr.mxu0 0.0
  %99 = vmatpush1.msra.mxu0 %v45
  %100 = vmatprep.subr.mxu0 0.0
  %101 = vmatpush1.msra.mxu0 %v44
  %102 = vmatprep.subr.mxu0 0.0
  %103 = vmatpush1.msra.mxu0 %v43
  %104 = vmatprep.subr.mxu0 0.0
  %105 = vmatpush2.msra.mxu0 0.0
  %106 = vmatprep.subr.mxu0 0.0
  %107 = vmatpush2.msra.mxu0 0.0
  %108 = vmatprep.subr.mxu0 0.0
  %109 = vmatpush2.msra.mxu0 0.0
  %110 = vmatprep.subr.mxu0 0.0
  %111 = vmatpush2.msra.mxu0 0.0
  %112 = vmatprep.subr.mxu0 0.0
  %113 = vmatpush2.msra.mxu0 0.0
  %114 = vmatprep.subr.mxu0 0.0
  %115 = vmatpush2.msra.mxu0 0.0
  %116 = vmatprep.subr.mxu0 0.0
  %117 = vmatpush2.msra.mxu0 0.0
  %118 = vmatprep.subr.mxu0 0.0
  %119 = vmatpush2.msra.mxu0 0.0
  %120 = vmatprep.subr.mxu0 0.0
  %121 = vmatpush2.msra.mxu0 0.0
  %122 = vmatprep.subr.mxu0 0.0
  %123 = vmatpush2.msra.mxu0 0.0
  %124 = vmatprep.subr.mxu0 0.0
  %125 = vmatpush2.msra.mxu0 0.0
  %126 = vmatprep.subr.mxu0 0.0
  %127 = vmatpush2.msra.mxu0 0.0
  %128 = vmatprep.subr.mxu0 0.0
  %129 = vmatpush2.msra.mxu0 0.0
  %130 = vmatprep.subr.mxu0 0.0
  %131 = vmatpush2.msra.mxu0 0.0
  %132 = vmatprep.subr.mxu0 0.0
  %133 = vmatpush2.msra.mxu0 0.0
  %134 = vmatprep.subr.mxu0 0.0
  %135 = vmatpush2.msra.mxu0 0.0
  %136 = vmatprep.mubr.f32.mxu0 0.0
  %137 = vmatmul.mubr.f32.gmra.mxu0 %v63
  %v138 = vpop.f32.mrf.mxu0
  %v139 = vadd.f32 %v54, %v138
  %v140 = vpop.f32.mrf.mxu0
  %141 = vmatprep.mubr.f32.mxu0 0.0
  %142 = vmatmul.mubr.f32.gmra.mxu0 %v66
  %v143 = vpop.f32.mrf.mxu0
  %v144 = vadd.f32 %v59, %v143
  %v145 = vpop.f32.mrf.mxu0
  %146 = vdwg.mxu0
  %v147 = vmax.f32 %v139, 0.0
  %v148 = vmax.f32 %v144, 0.0
  %v149 = vld [vmem:[%s4] sm:$0xff]
  %v150 = vld [vmem:[%s4 + $0x8] sm:$0xff]
  %v151 = vld [vmem:[%s4 + $0x10] sm:$0x3]
  %v152 = vld [vmem:[%s5] sm:$0xff]
  %v153 = vld [vmem:[%s5 + $0x8] sm:$0xff]
  %v154 = vld [vmem:[%s5 + $0x10] sm:$0x3]
  %156 = vset.pattern.permute.xlu0 0
  %157 = vperm.xlu0 %156, %v152
  %v158 = vpop.permute.xlu0 %157
  %161 = vset.pattern.permute.xlu0 0
  %162 = vperm.xlu0 %161, %v153
  %v163 = vpop.permute.xlu0 %162
  %166 = vset.pattern.permute.xlu0 0
  %167 = vperm.xlu0 %166, %v154
  %v168 = vpop.permute.xlu0 %167
  %vm170 = vcmask 130048
  %v172 = vsel %vm170, %v149, 0
  %v175 = vsel %vm170, %v150, 0
  %v178 = vsel %vm170, %v151, 0
  %180 = vmatprep.subr.mxu0 0.0
  %181 = vmatpush1.msra.mxu0 0.0
  %182 = vmatprep.subr.mxu0 0.0
  %183 = vmatpush1.msra.mxu0 0.0
  %184 = vmatprep.subr.mxu0 0.0
  %185 = vmatpush1.msra.mxu0 0.0
  %186 = vmatprep.subr.mxu0 0.0
  %187 = vmatpush1.msra.mxu0 0.0
  %188 = vmatprep.subr.mxu0 0.0
  %189 = vmatpush1.msra.mxu0 0.0
  %190 = vmatprep.subr.mxu0 0.0
  %191 = vmatpush1.msra.mxu0 0.0
  %192 = vmatprep.subr.mxu0 0.0
  %193 = vmatpush1.msra.mxu0 0.0
  %194 = vmatprep.subr.mxu0 0.0
  %195 = vmatpush1.msra.mxu0 0.0
  %196 = vmatprep.subr.mxu0 0.0
  %197 = vmatpush1.msra.mxu0 0.0
  %198 = vmatprep.subr.mxu0 0.0
  %199 = vmatpush1.msra.mxu0 0.0
  %200 = vmatprep.subr.mxu0 0.0
  %201 = vmatpush1.msra.mxu0 0.0
  %202 = vmatprep.subr.mxu0 0.0
  %203 = vmatpush1.msra.mxu0 0.0
  %204 = vmatprep.subr.mxu0 0.0
  %205 = vmatpush1.msra.mxu0 0.0
  %206 = vmatprep.subr.mxu0 0.0
  %207 = vmatpush1.msra.mxu0 0.0
  %208 = vmatprep.subr.mxu0 0.0
  %209 = vmatpush1.msra.mxu0 %v148
  %210 = vmatprep.subr.mxu0 0.0
  %211 = vmatpush1.msra.mxu0 %v147
  %212 = vmatprep.subr.mxu0 0.0
  %213 = vmatpush2.msra.mxu0 0.0
  %214 = vmatprep.subr.mxu0 0.0
  %215 = vmatpush2.msra.mxu0 0.0
  %216 = vmatprep.subr.mxu0 0.0
  %217 = vmatpush2.msra.mxu0 0.0
  %218 = vmatprep.subr.mxu0 0.0
  %219 = vmatpush2.msra.mxu0 0.0
  %220 = vmatprep.subr.mxu0 0.0
  %221 = vmatpush2.msra.mxu0 0.0
  %222 = vmatprep.subr.mxu0 0.0
  %223 = vmatpush2.msra.mxu0 0.0
  %224 = vmatprep.subr.mxu0 0.0
  %225 = vmatpush2.msra.mxu0 0.0
  %226 = vmatprep.subr.mxu0 0.0
  %227 = vmatpush2.msra.mxu0 0.0
  %228 = vmatprep.subr.mxu0 0.0
  %229 = vmatpush2.msra.mxu0 0.0
  %230 = vmatprep.subr.mxu0 0.0
  %231 = vmatpush2.msra.mxu0 0.0
  %232 = vmatprep.subr.mxu0 0.0
  %233 = vmatpush2.msra.mxu0 0.0
  %234 = vmatprep.subr.mxu0 0.0
  %235 = vmatpush2.msra.mxu0 0.0
  %236 = vmatprep.subr.mxu0 0.0
  %237 = vmatpush2.msra.mxu0 0.0
  %238 = vmatprep.subr.mxu0 0.0
  %239 = vmatpush2.msra.mxu0 0.0
  %240 = vmatprep.subr.mxu0 0.0
  %241 = vmatpush2.msra.mxu0 0.0
  %242 = vmatprep.subr.mxu0 0.0
  %243 = vmatpush2.msra.mxu0 0.0
  %244 = vmatprep.mubr.f32.mxu0 0.0
  %245 = vmatmul.mubr.f32.gmra.mxu0 %v172
  %v246 = vpop.f32.mrf.mxu0
  %v247 = vadd.f32 %v158, %v246
  %v248 = vpop.f32.mrf.mxu0
  %249 = vmatprep.mubr.f32.mxu0 0.0
  %250 = vmatmul.mubr.f32.gmra.mxu0 %v175
  %v251 = vpop.f32.mrf.mxu0
  %v252 = vadd.f32 %v163, %v251
  %v253 = vpop.f32.mrf.mxu0
  %254 = vmatprep.mubr.f32.mxu0 0.0
  %255 = vmatmul.mubr.f32.gmra.mxu0 %v178
  %v256 = vpop.f32.mrf.mxu0
  %v257 = vadd.f32 %v168, %v256
  %v258 = vpop.f32.mrf.mxu0
  %259 = vdwg.mxu0
  %v260 = vmax.f32 %v247, 0.0
  %v261 = vmax.f32 %v252, 0.0
  %v262 = vmax.f32 %v257, 0.0
  %v263 = vld [vmem:[%s1] sm:$0xff]
  %v264 = vld [vmem:[%s1 + $0x8] sm:$0xff]
  %v265 = vld [vmem:[%s1 + $0x10] sm:$0x3]
  %v266 = vmul.f32 %v260, %v263
  %v267 = vmul.f32 %v261, %v264
  %v268 = vmul.f32 %v262, %v265
  %v269 = vld [vmem:[%s6] sm:$0xff]
  %v270 = vld [vmem:[%s6 + $0x8] sm:$0xff]
  %v271 = vld [vmem:[%s6 + $0x10] sm:$0xf]
  %v272 = vld [vmem:[%s7] sm:$0xff]
  %v273 = vld [vmem:[%s7 + $0x8] sm:$0xff]
  %v274 = vld [vmem:[%s7 + $0x10] sm:$0xf]
  %276 = vset.pattern.permute.xlu0 0
  %277 = vperm.xlu0 %276, %v272
  %v278 = vpop.permute.xlu0 %277
  %281 = vset.pattern.permute.xlu0 0
  %282 = vperm.xlu0 %281, %v273
  %v283 = vpop.permute.xlu0 %282
  %286 = vset.pattern.permute.xlu0 0
  %287 = vperm.xlu0 %286, %v274
  %v288 = vpop.permute.xlu0 %287
  %vm290 = vcmask 146432
  %v292 = vsel %vm290, %v269, 0
  %v295 = vsel %vm290, %v270, 0
  %v298 = vsel %vm290, %v271, 0
  %vm300 = vcmask 1041408
  %v302 = vsel %vm300, %v268, 0
  %304 = vmatprep.subr.mxu0 0.0
  %305 = vmatpush1.msra.mxu0 0.0
  %306 = vmatprep.subr.mxu0 0.0
  %307 = vmatpush1.msra.mxu0 0.0
  %308 = vmatprep.subr.mxu0 0.0
  %309 = vmatpush1.msra.mxu0 0.0
  %310 = vmatprep.subr.mxu0 0.0
  %311 = vmatpush1.msra.mxu0 0.0
  %312 = vmatprep.subr.mxu0 0.0
  %313 = vmatpush1.msra.mxu0 0.0
  %314 = vmatprep.subr.mxu0 0.0
  %315 = vmatpush1.msra.mxu0 0.0
  %316 = vmatprep.subr.mxu0 0.0
  %317 = vmatpush1.msra.mxu0 0.0
  %318 = vmatprep.subr.mxu0 0.0
  %319 = vmatpush1.msra.mxu0 0.0
  %320 = vmatprep.subr.mxu0 0.0
  %321 = vmatpush1.msra.mxu0 0.0
  %322 = vmatprep.subr.mxu0 0.0
  %323 = vmatpush1.msra.mxu0 0.0
  %324 = vmatprep.subr.mxu0 0.0
  %325 = vmatpush1.msra.mxu0 0.0
  %326 = vmatprep.subr.mxu0 0.0
  %327 = vmatpush1.msra.mxu0 0.0
  %328 = vmatprep.subr.mxu0 0.0
  %329 = vmatpush1.msra.mxu0 0.0
  %330 = vmatprep.subr.mxu0 0.0
  %331 = vmatpush1.msra.mxu0 %v302
  %332 = vmatprep.subr.mxu0 0.0
  %333 = vmatpush1.msra.mxu0 %v267
  %334 = vmatprep.subr.mxu0 0.0
  %335 = vmatpush1.msra.mxu0 %v266
  %336 = vmatprep.subr.mxu0 0.0
  %337 = vmatpush2.msra.mxu0 0.0
  %338 = vmatprep.subr.mxu0 0.0
  %339 = vmatpush2.msra.mxu0 0.0
  %340 = vmatprep.subr.mxu0 0.0
  %341 = vmatpush2.msra.mxu0 0.0
  %342 = vmatprep.subr.mxu0 0.0
  %343 = vmatpush2.msra.mxu0 0.0
  %344 = vmatprep.subr.mxu0 0.0
  %345 = vmatpush2.msra.mxu0 0.0
  %346 = vmatprep.subr.mxu0 0.0
  %347 = vmatpush2.msra.mxu0 0.0
  %348 = vmatprep.subr.mxu0 0.0
  %349 = vmatpush2.msra.mxu0 0.0
  %350 = vmatprep.subr.mxu0 0.0
  %351 = vmatpush2.msra.mxu0 0.0
  %352 = vmatprep.subr.mxu0 0.0
  %353 = vmatpush2.msra.mxu0 0.0
  %354 = vmatprep.subr.mxu0 0.0
  %355 = vmatpush2.msra.mxu0 0.0
  %356 = vmatprep.subr.mxu0 0.0
  %357 = vmatpush2.msra.mxu0 0.0
  %358 = vmatprep.subr.mxu0 0.0
  %359 = vmatpush2.msra.mxu0 0.0
  %360 = vmatprep.subr.mxu0 0.0
  %361 = vmatpush2.msra.mxu0 0.0
  %362 = vmatprep.subr.mxu0 0.0
  %363 = vmatpush2.msra.mxu0 0.0
  %364 = vmatprep.subr.mxu0 0.0
  %365 = vmatpush2.msra.mxu0 0.0
  %366 = vmatprep.subr.mxu0 0.0
  %367 = vmatpush2.msra.mxu0 0.0
  %368 = vmatprep.mubr.f32.mxu0 0.0
  %369 = vmatmul.mubr.f32.gmra.mxu0 %v292
  %v370 = vpop.f32.mrf.mxu0
  %v371 = vadd.f32 %v278, %v370
  %v372 = vpop.f32.mrf.mxu0
  %373 = vmatprep.mubr.f32.mxu0 0.0
  %374 = vmatmul.mubr.f32.gmra.mxu0 %v295
  %v375 = vpop.f32.mrf.mxu0
  %v376 = vadd.f32 %v283, %v375
  %v377 = vpop.f32.mrf.mxu0
  %378 = vmatprep.mubr.f32.mxu0 0.0
  %379 = vmatmul.mubr.f32.gmra.mxu0 %v298
  %v380 = vpop.f32.mrf.mxu0
  %v381 = vadd.f32 %v288, %v380
  %v382 = vpop.f32.mrf.mxu0
  %383 = vdwg.mxu0
  %v384 = vmax.f32 %v371, 0.0
  %v385 = vmax.f32 %v376, 0.0
  %v386 = vmax.f32 %v381, 0.0
  %v387 = vld [vmem:[%s8] sm:$0xff]
  %v388 = vld [vmem:[%s8 + $0x8] sm:$0xff]
  %v389 = vld [vmem:[%s8 + $0x10] sm:$0xff]
  %v390 = vld [vmem:[%s9] sm:$0xff]
  %v391 = vld [vmem:[%s9 + $0x8] sm:$0xff]
  %v392 = vld [vmem:[%s9 + $0x10] sm:$0xff]
  %394 = vset.pattern.permute.xlu0 0
  %395 = vperm.xlu0 %394, %v390
  %v396 = vpop.permute.xlu0 %395
  %399 = vset.pattern.permute.xlu0 0
  %400 = vperm.xlu0 %399, %v391
  %v401 = vpop.permute.xlu0 %400
  %404 = vset.pattern.permute.xlu0 0
  %405 = vperm.xlu0 %404, %v392
  %v406 = vpop.permute.xlu0 %405
  %vm408 = vcmask 162816
  %v410 = vsel %vm408, %v387, 0
  %v413 = vsel %vm408, %v388, 0
  %v416 = vsel %vm408, %v389, 0
  %vm418 = vcmask 1043456
  %v420 = vsel %vm418, %v386, 0
  %422 = vmatprep.subr.mxu0 0.0
  %423 = vmatpush1.msra.mxu0 0.0
  %424 = vmatprep.subr.mxu0 0.0
  %425 = vmatpush1.msra.mxu0 0.0
  %426 = vmatprep.subr.mxu0 0.0
  %427 = vmatpush1.msra.mxu0 0.0
  %428 = vmatprep.subr.mxu0 0.0
  %429 = vmatpush1.msra.mxu0 0.0
  %430 = vmatprep.subr.mxu0 0.0
  %431 = vmatpush1.msra.mxu0 0.0
  %432 = vmatprep.subr.mxu0 0.0
  %433 = vmatpush1.msra.mxu0 0.0
  %434 = vmatprep.subr.mxu0 0.0
  %435 = vmatpush1.msra.mxu0 0.0
  %436 = vmatprep.subr.mxu0 0.0
  %437 = vmatpush1.msra.mxu0 0.0
  %438 = vmatprep.subr.mxu0 0.0
  %439 = vmatpush1.msra.mxu0 0.0
  %440 = vmatprep.subr.mxu0 0.0
  %441 = vmatpush1.msra.mxu0 0.0
  %442 = vmatprep.subr.mxu0 0.0
  %443 = vmatpush1.msra.mxu0 0.0
  %444 = vmatprep.subr.mxu0 0.0
  %445 = vmatpush1.msra.mxu0 0.0
  %446 = vmatprep.subr.mxu0 0.0
  %447 = vmatpush1.msra.mxu0 0.0
  %448 = vmatprep.subr.mxu0 0.0
  %449 = vmatpush1.msra.mxu0 %v420
  %450 = vmatprep.subr.mxu0 0.0
  %451 = vmatpush1.msra.mxu0 %v385
  %452 = vmatprep.subr.mxu0 0.0
  %453 = vmatpush1.msra.mxu0 %v384
  %454 = vmatprep.subr.mxu0 0.0
  %455 = vmatpush2.msra.mxu0 0.0
  %456 = vmatprep.subr.mxu0 0.0
  %457 = vmatpush2.msra.mxu0 0.0
  %458 = vmatprep.subr.mxu0 0.0
  %459 = vmatpush2.msra.mxu0 0.0
  %460 = vmatprep.subr.mxu0 0.0
  %461 = vmatpush2.msra.mxu0 0.0
  %462 = vmatprep.subr.mxu0 0.0
  %463 = vmatpush2.msra.mxu0 0.0
  %464 = vmatprep.subr.mxu0 0.0
  %465 = vmatpush2.msra.mxu0 0.0
  %466 = vmatprep.subr.mxu0 0.0
  %467 = vmatpush2.msra.mxu0 0.0
  %468 = vmatprep.subr.mxu0 0.0
  %469 = vmatpush2.msra.mxu0 0.0
  %470 = vmatprep.subr.mxu0 0.0
  %471 = vmatpush2.msra.mxu0 0.0
  %472 = vmatprep.subr.mxu0 0.0
  %473 = vmatpush2.msra.mxu0 0.0
  %474 = vmatprep.subr.mxu0 0.0
  %475 = vmatpush2.msra.mxu0 0.0
  %476 = vmatprep.subr.mxu0 0.0
  %477 = vmatpush2.msra.mxu0 0.0
  %478 = vmatprep.subr.mxu0 0.0
  %479 = vmatpush2.msra.mxu0 0.0
  %480 = vmatprep.subr.mxu0 0.0
  %481 = vmatpush2.msra.mxu0 0.0
  %482 = vmatprep.subr.mxu0 0.0
  %483 = vmatpush2.msra.mxu0 0.0
  %484 = vmatprep.subr.mxu0 0.0
  %485 = vmatpush2.msra.mxu0 0.0
  %486 = vmatprep.mubr.f32.mxu0 0.0
  %487 = vmatmul.mubr.f32.gmra.mxu0 %v410
  %v488 = vpop.f32.mrf.mxu0
  %v489 = vadd.f32 %v396, %v488
  %v490 = vpop.f32.mrf.mxu0
  %491 = vmatprep.mubr.f32.mxu0 0.0
  %492 = vmatmul.mubr.f32.gmra.mxu0 %v413
  %v493 = vpop.f32.mrf.mxu0
  %v494 = vadd.f32 %v401, %v493
  %v495 = vpop.f32.mrf.mxu0
  %496 = vmatprep.mubr.f32.mxu0 0.0
  %497 = vmatmul.mubr.f32.gmra.mxu0 %v416
  %v498 = vpop.f32.mrf.mxu0
  %v499 = vadd.f32 %v406, %v498
  %v500 = vpop.f32.mrf.mxu0
  %501 = vdwg.mxu0
  %v502 = vmax.f32 %v489, 0.0
  %v503 = vmax.f32 %v494, 0.0
  %v504 = vmax.f32 %v499, 0.0
  %v505 = vld [vmem:[%s10] sm:$0x1]
  %v506 = vld [vmem:[#allocation2] sm:$0x1]
  %508 = vset.pattern.permute.xlu0 0
  %509 = vperm.xlu0 %508, %v506
  %v510 = vpop.permute.xlu0 %509
  %v512 = vlaneseq
  %v513 = vshrl.u32 %v512, 7
  %v514 = vsub.s32 0, %v513
  %v515 = vrot.slane %v510, %v514
  %vm516 = vcmask 195584
  %v518 = vsel %vm516, %v505, 0
  %520 = vmatprep.subr.mxu0 0.0
  %521 = vmatpush1.msra.mxu0 0.0
  %522 = vmatprep.subr.mxu0 0.0
  %523 = vmatpush1.msra.mxu0 0.0
  %524 = vmatprep.subr.mxu0 0.0
  %525 = vmatpush1.msra.mxu0 0.0
  %526 = vmatprep.subr.mxu0 0.0
  %527 = vmatpush1.msra.mxu0 0.0
  %528 = vmatprep.subr.mxu0 0.0
  %529 = vmatpush1.msra.mxu0 0.0
  %530 = vmatprep.subr.mxu0 0.0
  %531 = vmatpush1.msra.mxu0 0.0
  %532 = vmatprep.subr.mxu0 0.0
  %533 = vmatpush1.msra.mxu0 0.0
  %534 = vmatprep.subr.mxu0 0.0
  %535 = vmatpush1.msra.mxu0 0.0
  %536 = vmatprep.subr.mxu0 0.0
  %537 = vmatpush1.msra.mxu0 0.0
  %538 = vmatprep.subr.mxu0 0.0
  %539 = vmatpush1.msra.mxu0 0.0
  %540 = vmatprep.subr.mxu0 0.0
  %541 = vmatpush1.msra.mxu0 0.0
  %542 = vmatprep.subr.mxu0 0.0
  %543 = vmatpush1.msra.mxu0 0.0
  %544 = vmatprep.subr.mxu0 0.0
  %545 = vmatpush1.msra.mxu0 0.0
  %546 = vmatprep.subr.mxu0 0.0
  %547 = vmatpush1.msra.mxu0 %v504
  %548 = vmatprep.subr.mxu0 0.0
  %549 = vmatpush1.msra.mxu0 %v503
  %550 = vmatprep.subr.mxu0 0.0
  %551 = vmatpush1.msra.mxu0 %v502
  %552 = vmatprep.subr.mxu0 0.0
  %553 = vmatpush2.msra.mxu0 0.0
  %554 = vmatprep.subr.mxu0 0.0
  %555 = vmatpush2.msra.mxu0 0.0
  %556 = vmatprep.subr.mxu0 0.0
  %557 = vmatpush2.msra.mxu0 0.0
  %558 = vmatprep.subr.mxu0 0.0
  %559 = vmatpush2.msra.mxu0 0.0
  %560 = vmatprep.subr.mxu0 0.0
  %561 = vmatpush2.msra.mxu0 0.0
  %562 = vmatprep.subr.mxu0 0.0
  %563 = vmatpush2.msra.mxu0 0.0
  %564 = vmatprep.subr.mxu0 0.0
  %565 = vmatpush2.msra.mxu0 0.0
  %566 = vmatprep.subr.mxu0 0.0
  %567 = vmatpush2.msra.mxu0 0.0
  %568 = vmatprep.subr.mxu0 0.0
  %569 = vmatpush2.msra.mxu0 0.0
  %570 = vmatprep.subr.mxu0 0.0
  %571 = vmatpush2.msra.mxu0 0.0
  %572 = vmatprep.subr.mxu0 0.0
  %573 = vmatpush2.msra.mxu0 0.0
  %574 = vmatprep.subr.mxu0 0.0
  %575 = vmatpush2.msra.mxu0 0.0
  %576 = vmatprep.subr.mxu0 0.0
  %577 = vmatpush2.msra.mxu0 0.0
  %578 = vmatprep.subr.mxu0 0.0
  %579 = vmatpush2.msra.mxu0 0.0
  %580 = vmatprep.subr.mxu0 0.0
  %581 = vmatpush2.msra.mxu0 0.0
  %582 = vmatprep.subr.mxu0 0.0
  %583 = vmatpush2.msra.mxu0 0.0
  %584 = vmatprep.mubr.f32.mxu0 0.0
  %585 = vmatmul.mubr.f32.gmra.mxu0 %v518
  %v586 = vpop.f32.mrf.mxu0
  %v587 = vadd.f32 %v515, %v586
  %v588 = vpop.f32.mrf.mxu0
  %589 = vdwg.mxu0
  %v590 = vxor.u32 %v587, 2147483648
  %v591 = vmul.f32 %v590, 1.442695
  %v592 = vpow.pop %v591
  %v593 = vadd.f32 %v592, 1.0
  %v594 = vrcp.pop %v593
  %v595 = vmul.f32 1.0, %v594
  %596 = vst [vmem:[%s12] sm:$0x1] %v595
  // Predicated region
  $region50: #{_fraud_net_impl.1} parent=0 // pred_check
    _
  $region51: #{_fraud_net_impl.1} parent=0 // pred_check_branch
    %598 = sbr.rel (0) target = $region53
  $region52: #{_fraud_net_impl.1} parent=0 // pred_region
    _
  $region53: #{_fraud_net_impl.1} parent=0 // pred_fallthru
    _
  // Predicated region
  $region54: #{_fraud_net_impl.1} parent=0 // pred_check
    _
  $region55: #{_fraud_net_impl.1} parent=0 // pred_check_branch
    %600 = sbr.rel (0) target = $region57
  $region56: #{_fraud_net_impl.1} parent=0 // pred_region
    _
  $region57: #{_fraud_net_impl.1} parent=0 // pred_fallthru
    _

</llo_original>
